<compile_context>
chip_gen: v6e
topology: v6e:2x2x1
jax: 0.10.0
libtpu: 0.0.40
codegen_flags: <defaults>
</compile_context>

<pallas_src>
import numpy as np
import jax
import jax.numpy as jnp
from jax.experimental import pallas as pl
from jax.experimental.pallas import tpu as pltpu

_LANE = 128
_PARAM_COLS = 3  # [w = 2*pi*softplus(freq), a = tanh(amp)*range, p = softplus(phase)]


def _cpg_kernel(t_ref, params_ref, mu_ref):
    # t_ref:      (1, TILE_B)   time row for this batch tile
    # params_ref: (A, 3)        packed [w | a | p] columns (precomputed in wrapper)
    # mu_ref:     (A, TILE_B)   transposed output tile (lane-dense)
    t = t_ref[...]                                     # (1, TILE_B)
    w = params_ref[:, 0:1]                             # (A, 1)
    a = params_ref[:, 1:2]                             # (A, 1)
    p = params_ref[:, 2:3]                             # (A, 1)
    # (A,1) broadcast against (1,TILE_B) -> (A, TILE_B); compute in f32.
    mu = a * jnp.sin(w * t + p)
    mu_ref[...] = mu.astype(mu_ref.dtype)


def cpg_policy_forward(obs, frequencies, amplitudes, phases, range_const,
                       *, max_tile_b=65536, min_pallas_batch=2048,
                       out_dtype=jnp.float32):
    """obs: (B, OBS_DIM); params: (A,) each. Returns mu: (B, A)."""
    obs = obs.astype(jnp.float32)
    b = obs.shape[0]
    a_dim = frequencies.shape[0]

    # Hoisted parameter transforms (5-element vectors; trivially fused by XLA).
    w = jnp.float32(2.0 * np.pi) * jax.nn.softplus(frequencies.astype(jnp.float32))
    a = jnp.tanh(amplitudes.astype(jnp.float32)) * range_const.astype(jnp.float32)
    p = jax.nn.softplus(phases.astype(jnp.float32))

    # Small-batch fast path: one fused XLA elementwise op beats the custom-call
    # launch + t_row materialization + output relayout for tiny B.
    if b < min_pallas_batch:
        t = obs[:, -1]
        mu = a[None, :] * jnp.sin(w[None, :] * t[:, None] + p[None, :])
        return mu.astype(out_dtype)

    # Only the last column of obs is used -> lane-dense (1, B) row.
    # (allow_input_fusion below lets this slice fuse into the pallas inputs.)
    t_row = obs[:, -1].reshape(1, b)

    # Packed (A, 3) parameter block: one DMA, one padded VMEM tile.
    params = jnp.stack([w, a, p], axis=1)              # (A, 3)

    # Batch tiling: tiles are multiples of 128 lanes and as large as possible
    # (up to max_tile_b), but capped at ~half the batch so the grid has length
    # >= 2 whenever B spans more than one lane chunk (v7x 2-TC sharding).
    lanes = pl.cdiv(b, _LANE)
    max_tile_lanes = max(1, max_tile_b // _LANE)
    tile_lanes = 1 if lanes <= 1 else min(max_tile_lanes, pl.cdiv(lanes, 2))
    tile_b = tile_lanes * _LANE
    padded_b = pl.cdiv(b, tile_b) * tile_b
    if padded_b != b:
        t_row = jnp.pad(t_row, ((0, 0), (0, padded_b - b)))
    grid = (padded_b // tile_b,)

    out_itemsize = jnp.dtype(out_dtype).itemsize
    cost = pl.CostEstimate(
        flops=3 * padded_b * a_dim,
        transcendentals=padded_b * a_dim,
        bytes_accessed=4 * (padded_b + _PARAM_COLS * a_dim)
                       + out_itemsize * a_dim * padded_b)

    mu_t = pl.pallas_call(
        _cpg_kernel,
        out_shape=jax.ShapeDtypeStruct((a_dim, padded_b), out_dtype),
        grid=grid,
        in_specs=[
            pl.BlockSpec((1, tile_b), lambda i: (0, i)),            # time row tile
            pl.BlockSpec((a_dim, _PARAM_COLS), lambda i: (0, 0)),   # packed params
        ],
        out_specs=pl.BlockSpec((a_dim, tile_b), lambda i: (0, i)),
        compiler_params=pltpu.CompilerParams(
            dimension_semantics=("parallel",),
            allow_input_fusion=[True, True]),
        cost_estimate=cost,
    )(t_row, params)

    # TODO(synk): the module's mandatory (B, A) return layout forces one
    # relayout of the largest array; fuse this transpose into the downstream
    # consumer (or consume the (A, B) layout directly) when possible.
    return mu_t[:, :b].T


def _reference_forward(obs, frequencies, amplitudes, phases, range_const):
    """Pure-JAX reference mirroring the PyTorch module's forward()."""
    t = obs[..., -1]                                   # (B,)
    f = jax.nn.softplus(frequencies)                   # (A,)
    a = jnp.tanh(amplitudes) * range_const             # (A,)
    p = jax.nn.softplus(phases)                        # (A,)
    return a[None, :] * jnp.sin(2.0 * np.pi * f[None, :] * t[:, None] + p[None, :])


if __name__ == "__main__":
    key = jax.random.PRNGKey(0)
    k_obs_s, k_obs_l, k_f, k_a, k_p = jax.random.split(key, 5)

    num_actuators = 5          # matches the module's hard-coded 5-element range
    obs_dim = 16

    frequencies = jax.random.normal(k_f, (num_actuators,), dtype=jnp.float32)
    amplitudes = jax.random.normal(k_a, (num_actuators,), dtype=jnp.float32)
    phases = jax.random.normal(k_p, (num_actuators,), dtype=jnp.float32)
    range_const = jnp.array([np.pi / 2, np.pi, np.pi / 2, np.pi, np.pi / 2],
                            dtype=jnp.float32)

    # Small batch (module-scale, B=2): exercises the fused-XLA fast path.
    obs_small = jax.random.normal(k_obs_s, (2, obs_dim), dtype=jnp.float32)
    mu_small = jax.block_until_ready(
        cpg_policy_forward(obs_small, frequencies, amplitudes, phases, range_const))
    np.testing.assert_allclose(
        np.asarray(mu_small),
        np.asarray(_reference_forward(obs_small, frequencies, amplitudes,
                                      phases, range_const)),
        rtol=1e-5, atol=1e-5)

    # Larger batch: exercises the Pallas path (grid of 2 tiles + lane padding).
    obs_large = jax.random.normal(k_obs_l, (2300, obs_dim), dtype=jnp.float32)
    mu_large = jax.block_until_ready(
        cpg_policy_forward(obs_large, frequencies, amplitudes, phases, range_const))
    np.testing.assert_allclose(
        np.asarray(mu_large),
        np.asarray(_reference_forward(obs_large, frequencies, amplitudes,
                                      phases, range_const)),
        rtol=1e-5, atol=1e-5)

    print("KERNEL_OK")
</pallas_src>

<mosaic_0001>
module attributes {stable_mosaic.version = 11 : i64} {
  func.func @_cpg_kernel(%arg0: i32, %arg1: memref<1x1152xf32, #tpu.memory_space<vmem>>, %arg2: memref<5x3xf32, #tpu.memory_space<vmem>>, %arg3: memref<5x1152xf32, #tpu.memory_space<vmem>>) attributes {dimension_semantics = [#tpu.dimension_semantics<parallel>], iteration_bounds = array<i64: 2>, scalar_prefetch = 0 : i64, scratch_operands = 0 : i64, tpu.core_type = #tpu.core_type<tc>, window_params = [{transform_indices = @transform_0, window_bounds = array<i64: 1, 1152>}, {pipeline_mode = #tpu.pipeline_mode<synchronous>, transform_indices = @transform_1, window_bounds = array<i64: 5, 3>}, {transform_indices = @transform_2, window_bounds = array<i64: 5, 1152>}]} {
    %c0 = arith.constant 0 : index
    %c0_0 = arith.constant 0 : index
    %0 = vector.load %arg1[%c0, %c0_0] : memref<1x1152xf32, #tpu.memory_space<vmem>>, vector<1x1152xf32>
    %c0_1 = arith.constant 0 : index
    %c0_2 = arith.constant 0 : index
    %1 = vector.load %arg2[%c0_1, %c0_2] : memref<5x3xf32, #tpu.memory_space<vmem>>, vector<5x1xf32>
    %c0_3 = arith.constant 0 : index
    %c1 = arith.constant 1 : index
    %2 = vector.load %arg2[%c0_3, %c1] : memref<5x3xf32, #tpu.memory_space<vmem>>, vector<5x1xf32>
    %c0_4 = arith.constant 0 : index
    %c2 = arith.constant 2 : index
    %3 = vector.load %arg2[%c0_4, %c2] : memref<5x3xf32, #tpu.memory_space<vmem>>, vector<5x1xf32>
    %4 = vector.broadcast %1 : vector<5x1xf32> to vector<5x1152xf32>
    %5 = vector.broadcast %0 : vector<1x1152xf32> to vector<5x1152xf32>
    %6 = arith.mulf %4, %5 : vector<5x1152xf32>
    %7 = vector.broadcast %3 : vector<5x1xf32> to vector<5x1152xf32>
    %8 = arith.addf %6, %7 : vector<5x1152xf32>
    %9 = math.sin %8 : vector<5x1152xf32>
    %10 = vector.broadcast %2 : vector<5x1xf32> to vector<5x1152xf32>
    %11 = arith.mulf %10, %9 : vector<5x1152xf32>
    %c0_5 = arith.constant 0 : index
    %c0_6 = arith.constant 0 : index
    %12 = vector.load %arg3[%c0_5, %c0_6] : memref<5x1152xf32, #tpu.memory_space<vmem>>, vector<5x1152xf32>
    tpu.vector_store %arg3[%c0_5, %c0_6], %11 {strides = array<i32>} : memref<5x1152xf32, #tpu.memory_space<vmem>>, vector<5x1152xf32>,
    return
  }
  func.func @transform_0(%arg0: i32) -> (i32, i32) {
    %c0_i32 = arith.constant 0 : i32
    %c0_i32_0 = arith.constant 0 : i32
    return %c0_i32, %arg0 : i32, i32
  }
  func.func @transform_1(%arg0: i32) -> (i32, i32) {
    %c0_i32 = arith.constant 0 : i32
    %c0_i32_0 = arith.constant 0 : i32
    %c0_i32_1 = arith.constant 0 : i32
    return %c0_i32, %c0_i32_0 : i32, i32
  }
  func.func @transform_2(%arg0: i32) -> (i32, i32) {
    %c0_i32 = arith.constant 0 : i32
    %c0_i32_0 = arith.constant 0 : i32
    return %c0_i32, %arg0 : i32, i32
  }
}

</mosaic_0001>

<llo_original>
// kernel: tpu_custom_call.1
$region0: #{tpu_custom_call.1}
  #allocation0 [shape = 'u32[]', space=smem, size = 0x4, offset = 0x4, fixed_abs, tag = 'smem constant byte address 0x4 - core index']
  #allocation1 [shape = 'u32[144,128]{1,0:T(1,128)}', space=vmem, size = 0x12000, scoped, tag = 'internal scratch']
  %s0 = inlined_call_operand.hbm [shape: f32[1,2304], index: 0, kind: input, shape index: {}]
  %s1 = inlined_call_operand.vmem [shape: f32[5,3], index: 1, kind: input, shape index: {}]
  %s2 = inlined_call_operand.hbm [shape: f32[5,2304], index: 2, kind: output, shape index: {}]
  %s3 = sld [smem:[#allocation0]]
  $region45: #{tpu_custom_call.1} parent=0
    _
  %s5 = ssub.s32 1, %s3
  %s6 = scalar_select 0, %s5, %s3
  $region1: #{tpu_custom_call.1} parent=0
    #allocation2 [shape = 'u8[9216]{0}', space=vmem, size = 0x2400, scoped, tag = 'input window, operand 0']
    #allocation3 [shape = 's32[2]{0}', space=sflag, size = 0x8, scoped, tag = 'scoped memory for tpu_custom_call.1']
    #allocation4 [shape = 's32[2]{0}', space=sflag, size = 0x8, scoped, tag = 'scoped memory for tpu_custom_call.1']
    #allocation5 [shape = 'u8[73728]{0}', space=vmem, size = 0x12000, scoped, tag = 'output window, operand 0']
    %7 = vsyncpa [#allocation3], 0
    %s8 = scalar_lea.sflag [#allocation3], 1
    %9 = vsyncpa %s8, 0
    %10 = vsyncpa [#allocation4], 0
    %s11 = scalar_lea.sflag [#allocation4], 1
    %12 = vsyncpa %s11, 0
    loop: start=0, step=1, limit=4
    $region2: #{tpu_custom_call.1} parent=1 // loop_pre_header
      _
    $region3: #{tpu_custom_call.1} parent=1 // loop_header
      %s14 = sphi 0, %s18
      %p15 = scmp.ge.s32.totalorder %s14, 4
      %s24 = sphi 0, %s26
      %s27 = sphi 0, %s24
      %s28 = sphi 0, %s27
      %s44 = sphi 0, %s28
      %s48 = sphi 0, %s48
      %s50 = sphi 0, %s48
      %s51 = sphi 0, %s50
      %s65 = sphi 0, %s51
      %s71 = sphi 0, %s73
      %s74 = sphi 0, %s71
      %s75 = sphi 0, %s74
      %s91 = sphi 0, %s75
    $region4: #{tpu_custom_call.1} parent=1 // loop_header_branch
      %17 = sbr.rel (%p15) target = $region8
    $region5: #{tpu_custom_call.1} parent=1 // loop_body
      %s19 = ssub.s32 %s14, 1
      %s20 = ssub.s32 %s14, 2
      %s21 = sadd.s32 %s14, 1
      %s22 = ssub.s32 %s14, %s21
      %p23 = scmp.eq.s32.totalorder %s22, 0
      %s25 = sadd.s32 %s24, 1
      %s26 = scalar_select %p23, %s24, %s25
      %p29 = pneg %p23
      %p30 = scmp.eq.s32.totalorder %s14, 1
      %p31 = por %p29, %p30
      %p32 = scmp.ne.s32.totalorder %s24, %s27
      %p33 = scmp.eq.s32.totalorder %s14, 0
      %p34 = por %p32, %p33
      %p35 = scmp.ne.s32.totalorder %s24, %s27
      %p36 = scmp.eq.s32.totalorder %s19, 1
      %p37 = por %p35, %p36
      %p38 = scmp.ne.s32.totalorder %s27, %s28
      %p39 = scmp.eq.s32.totalorder %s19, 0
      %p40 = por %p38, %p39
      %p41 = scmp.ne.s32.totalorder %s27, %s28
      %p42 = scmp.eq.s32.totalorder %s20, 1
      %p43 = por %p41, %p42
      %p45 = scmp.ne.s32.totalorder %s28, %s44
      %p46 = scmp.eq.s32.totalorder %s20, 0
      %p47 = por %p45, %p46
      %s49 = sadd.s32 %s48, 1
      %p52 = scmp.eq.s32.totalorder %s14, 1
      %p53 = scmp.ne.s32.totalorder %s48, %s50
      %p54 = scmp.eq.s32.totalorder %s14, 0
      %p55 = por %p53, %p54
      %p56 = scmp.ne.s32.totalorder %s48, %s50
      %p57 = scmp.eq.s32.totalorder %s19, 1
      %p58 = por %p56, %p57
      %p59 = scmp.ne.s32.totalorder %s50, %s51
      %p60 = scmp.eq.s32.totalorder %s19, 0
      %p61 = por %p59, %p60
      %p62 = scmp.ne.s32.totalorder %s50, %s51
      %p63 = scmp.eq.s32.totalorder %s20, 1
      %p64 = por %p62, %p63
      %p66 = scmp.ne.s32.totalorder %s51, %s65
      %p67 = scmp.eq.s32.totalorder %s20, 0
      %p68 = por %p66, %p67
      %s69 = ssub.s32 %s14, %s21
      %p70 = scmp.eq.s32.totalorder %s69, 0
      %s72 = sadd.s32 %s71, 1
      %s73 = scalar_select %p70, %s71, %s72
      %p76 = pneg %p70
      %p77 = scmp.eq.s32.totalorder %s14, 1
      %p78 = por %p76, %p77
      %p79 = scmp.ne.s32.totalorder %s71, %s74
      %p80 = scmp.eq.s32.totalorder %s14, 0
      %p81 = por %p79, %p80
      %p82 = scmp.ne.s32.totalorder %s71, %s74
      %p83 = scmp.eq.s32.totalorder %s19, 1
      %p84 = por %p82, %p83
      %p85 = scmp.ne.s32.totalorder %s74, %s75
      %p86 = scmp.eq.s32.totalorder %s19, 0
      %p87 = por %p85, %p86
      %p88 = scmp.ne.s32.totalorder %s74, %s75
      %p89 = scmp.eq.s32.totalorder %s20, 1
      %p90 = por %p88, %p89
      %p92 = scmp.ne.s32.totalorder %s75, %s91
      %p93 = scmp.eq.s32.totalorder %s20, 0
      %p94 = por %p92, %p93
      %p95 = scmp.le.s32.totalorder 1, %s14
      %p96 = scmp.lt.s32.totalorder %s14, 3
      %p97 = pnand %p95, %p96
      %p98 = pneg %p97
      // Predicated region
      $region9: #{tpu_custom_call.1} parent=5 // pred_check
        _
      $region10: #{tpu_custom_call.1} parent=5 // pred_check_branch
        %100 = sbr.rel (%p97) target = $region12
      $region11: #{tpu_custom_call.1} parent=5 // pred_region
        %s101 = ssub.s32 %s14, 1
        // Predicated region
        $region13: #{tpu_custom_call.1} parent=11 // pred_check
          %p102 = pneg %p61
        $region14: #{tpu_custom_call.1} parent=11 // pred_check_branch
          %104 = sbr.rel (%p102) target = $region16
        $region15: #{tpu_custom_call.1} parent=11 // pred_region
          _
        $region16: #{tpu_custom_call.1} parent=11 // pred_fallthru
          _
      $region12: #{tpu_custom_call.1} parent=5 // pred_fallthru
        _
      %p105 = scmp.lt.s32.totalorder %s14, 2
      // Predicated region
      $region17: #{tpu_custom_call.1} parent=5 // pred_check
        %p106 = pneg %p105
      $region18: #{tpu_custom_call.1} parent=5 // pred_check_branch
        %108 = sbr.rel (%p106) target = $region20
      $region19: #{tpu_custom_call.1} parent=5 // pred_region
        // Predicated region
        $region21: #{tpu_custom_call.1} parent=19 // pred_check
          %p109 = pneg %p34
        $region22: #{tpu_custom_call.1} parent=19 // pred_check_branch
          %111 = sbr.rel (%p109) target = $region24
        $region23: #{tpu_custom_call.1} parent=19 // pred_region
          %s112 = sand.u32 %s24, 1
          %s113 = scalar_lea.sflag [#allocation3], %s112
          %s114 = sand.u32 %s24, 1
          %s115 = smul.addr %s114, 9
          %s116 = scalar_lea.vmem [#allocation2], %s115
          %s117 = smul.u32 9, %s14
          %s119 = ssub.s32 144, 144
          %120 = vsyncadd %s113, %s119
          %s121 = smul.addr %s117, 16
          %s122 = scalar_lea.hbm %s0, %s121
          %s124 = sshll.u32 %s116, 4
          %s125 = int_to_ptr.vmem [resolvable:$true] %s124
          %127 = dma.hbm_to_vmem [thread:$0]  %s122, 144, %s125, %s113
        $region24: #{tpu_custom_call.1} parent=19 // pred_fallthru
          _
      $region20: #{tpu_custom_call.1} parent=5 // pred_fallthru
        _
      %p128 = scmp.le.s32.totalorder 1, %s14
      %p129 = scmp.lt.s32.totalorder %s14, 3
      %p130 = pnand %p128, %p129
      %p131 = pneg %p130
      // Predicated region
      $region25: #{tpu_custom_call.1} parent=5 // pred_check
        _
      $region26: #{tpu_custom_call.1} parent=5 // pred_check_branch
        %133 = sbr.rel (%p130) target = $region28
      $region27: #{tpu_custom_call.1} parent=5 // pred_region
        %s134 = ssub.s32 %s14, 1
        %s135 = sand.u32 %s27, 1
        %s136 = scalar_lea.sflag [#allocation3], %s135
        %s137 = sand.u32 %s27, 1
        %s138 = smul.addr %s137, 9
        %s139 = scalar_lea.vmem [#allocation2], %s138
        // Predicated region
        $region29: #{tpu_custom_call.1} parent=27 // pred_check
          %p140 = pneg %p40
        $region30: #{tpu_custom_call.1} parent=27 // pred_check_branch
          %142 = sbr.rel (%p140) target = $region32
        $region31: #{tpu_custom_call.1} parent=27 // pred_region
          %143 = dma.done %s136, 144
        $region32: #{tpu_custom_call.1} parent=27 // pred_fallthru
          _
        %s144 = sand.u32 %s27, 1
        %s145 = scalar_lea.sflag [#allocation3], %s144
        %s146 = sand.u32 %s27, 1
        %s147 = smul.addr %s146, 9
        %s148 = scalar_lea.vmem [#allocation2], %s147
        %p149 = pneg %p40
        %p150 = pneg %p37
        %p151 = pneg %p61
        %p152 = pneg %p58
        %p153 = pneg %p87
        %p154 = pneg %p84
        %s155 = sand.u32 %s74, 1
        %s156 = scalar_lea.sflag [#allocation4], %s155
        %s157 = sand.u32 %s74, 1
        %s158 = smul.addr %s157, 72
        %s159 = scalar_lea.vmem [#allocation5], %s158
        %s160 = smul.u32 9, %s19
        %s161 = smul.u32 9, %s19
        %v162 = vld [vmem:[%s139] sm:$0xff]
        %v163 = vld [vmem:[%s139 + $0x8] sm:$0x1]
        %v164 = vld [vmem:[%s1] sm:$0x1f]
        %166 = vset.pattern.permute.xlu0 0
        %167 = vperm.xlu0 %166, %v164
        %v168 = vpop.permute.xlu0 %167
        %v172 = vlaneseq
        %v173 = vshrl.u32 %v172, 7
        %v174 = vsub.s32 0, %v173
        %v175 = vrot.slane %v162, %v174
        %v176 = vlaneseq
        %v177 = vshrl.u32 %v176, 7
        %v178 = vsub.s32 1, %v177
        %v179 = vrot.slane %v162, %v178
        %v180 = vlaneseq
        %v181 = vshrl.u32 %v180, 7
        %v182 = vsub.s32 2, %v181
        %v183 = vrot.slane %v162, %v182
        %v184 = vlaneseq
        %v185 = vshrl.u32 %v184, 7
        %v186 = vsub.s32 3, %v185
        %v187 = vrot.slane %v162, %v186
        %v188 = vlaneseq
        %v189 = vshrl.u32 %v188, 7
        %v190 = vsub.s32 4, %v189
        %v191 = vrot.slane %v162, %v190
        %v192 = vlaneseq
        %v193 = vshrl.u32 %v192, 7
        %v194 = vsub.s32 5, %v193
        %v195 = vrot.slane %v162, %v194
        %v196 = vlaneseq
        %v197 = vshrl.u32 %v196, 7
        %v198 = vsub.s32 6, %v197
        %v199 = vrot.slane %v162, %v198
        %v200 = vlaneseq
        %v201 = vshrl.u32 %v200, 7
        %v202 = vsub.s32 7, %v201
        %v203 = vrot.slane %v162, %v202
        %v204 = vlaneseq
        %v205 = vshrl.u32 %v204, 7
        %v206 = vsub.s32 0, %v205
        %v207 = vrot.slane %v163, %v206
        %v217 = vmul.f32 %v168, %v175
        %v218 = vmul.f32 %v168, %v179
        %v219 = vmul.f32 %v168, %v183
        %v220 = vmul.f32 %v168, %v187
        %v221 = vmul.f32 %v168, %v191
        %v222 = vmul.f32 %v168, %v195
        %v223 = vmul.f32 %v168, %v199
        %v224 = vmul.f32 %v168, %v203
        %v225 = vmul.f32 %v168, %v207
        %226 = vset.pattern.permute.xlu0 2
        %227 = vperm.xlu0 %226, %v164
        %v228 = vpop.permute.xlu0 %227
        %v230 = vadd.f32 %v217, %v228
        %v231 = vadd.f32 %v218, %v228
        %v232 = vadd.f32 %v219, %v228
        %v233 = vadd.f32 %v220, %v228
        %v234 = vadd.f32 %v221, %v228
        %v235 = vadd.f32 %v222, %v228
        %v236 = vadd.f32 %v223, %v228
        %v237 = vadd.f32 %v224, %v228
        %v238 = vadd.f32 %v225, %v228
        %v239 = vand.u32 2147483647, %v230
        %vm240 = vcmp.le.f32.partialorder %v239, 0.7853982
        %vm241 = vcmp.lt.s32.totalorder %v230, 0
        %v242 = vand.u32 %v230, 2139095040
        %v243 = vshrl.u32 %v242, 23
        %v244 = vsub.s32 %v243, 127
        %v245 = vand.u32 2147483647, %v230
        %v246 = vand.u32 %v245, 8388607
        %v247 = vor.u32 %v246, 8388608
        %v248 = vsub.s32 0, %v247
        %v249 = vadd.s32 %v244, 1
        %vm250 = vcmp.gt.s32.totalorder %v249, 0
        %v251 = vsel %vm250, %v249, 0
        %v252 = vshrl.u32 %v251, 5
        %v253 = vand.u32 %v251, 31
        %v254 = vsub.s32 32, %v253
        %v255 = vshrl.u32 683565275, %v254
        %v256 = vshll.u32 683565275, %v253
        %v257 = vshrl.u32 2475754826, %v254
        %v258 = vor.u32 %v256, %v257
        %v259 = vshll.u32 2475754826, %v253
        %v260 = vshrl.u32 2131351028, %v254
        %v261 = vor.u32 %v259, %v260
        %v262 = vshll.u32 2131351028, %v253
        %v263 = vshrl.u32 2102212464, %v254
        %v264 = vor.u32 %v262, %v263
        %v265 = vshll.u32 2102212464, %v253
        %v266 = vshrl.u32 920167782, %v254
        %v267 = vor.u32 %v265, %v266
        %v268 = vshll.u32 920167782, %v253
        %v269 = vshrl.u32 1326507024, %v254
        %v270 = vor.u32 %v268, %v269
        %vm271 = vcmp.lt.s32.totalorder %v252, 1
        %vm272 = vcmp.lt.s32.totalorder %v252, 2
        %vm273 = vcmp.lt.s32.totalorder %v252, 3
        %vm274 = vcmp.lt.s32.totalorder %v252, 4
        %v275 = vsel %vm271, %v255, %v258
        %v276 = vsel %vm274, %v264, 2102212464
        %v277 = vsel %vm273, %v261, %v276
        %v278 = vsel %vm272, %v275, %v277
        %v279 = vsel %vm271, %v258, %v261
        %v280 = vsel %vm274, %v267, 920167782
        %v281 = vsel %vm273, %v264, %v280
        %v282 = vsel %vm272, %v279, %v281
        %v283 = vsel %vm271, %v261, %v264
        %v284 = vsel %vm274, %v270, 1326507024
        %v285 = vsel %vm273, %v267, %v284
        %v286 = vsel %vm272, %v283, %v285
        %v287 = vshll.u32 %v247, 8
        %v288 = vmul.u32.u64.compose %v287, %v286
        %v289 = vextract.low.u32 %v288
        %v290 = vextract.high.u32 %v288
        %v291 = vmul.u32.u64.compose %v287, %v282
        %v292 = vextract.low.u32 %v291
        %v293 = vextract.high.u32 %v291
        %v294 = vmul.u32 %v287, %v278
        %v295 = vadd.s32 %v290, %v292
        %vm296 = vc.u32 %v290, %v292
        %v297 = vadd.s32 %v293, 1
        %v298 = vsel %vm296, %v297, %v293
        %v299 = vadd.s32 %v294, %v298
        %v300 = vadd.s32 %v299, 536870912
        %v301 = vshrl.u32 %v300, 30
        %v302 = vshll.u32 %v301, 30
        %v303 = vsub.s32 %v299, %v302
        %vm304 = vcmp.lt.s32.totalorder %v303, 0
        %v305 = vsub.s32 0, %v303
        %v306 = vsel %vm304, %v305, %v303
        %v307 = vclz %v306
        %v308 = vsub.s32 %v307, 2
        %vm309 = vcmp.gt.s32.totalorder 0, %v308
        %v310 = vsel %vm309, 0, %v308
        %v311 = vsub.s32 32, %v310
        %v312 = vshll.u32 %v303, %v310
        %v313 = vshrl.u32 %v295, %v311
        %v314 = vor.u32 %v312, %v313
        %v315 = vsub.s32 4294967266, %v310
        %v316 = vadd.s32 %v315, 127
        %v317 = vshll.u32 %v316, 23
        %v318 = vor.u32 4788187, %v317
        %v319 = vand.u32 2147483647, %v318
        %v321 = vcvt.s32.f32 %v314
        %v322 = vmul.f32 %v321, %v319
        %v323 = vxor.u32 %v322, 2147483648
        %v324 = vsel %vm241, %v323, %v322
        %v325 = vsub.s32 4, %v301
        %v326 = vsel %vm241, %v325, %v301
        %v327 = vsel %vm240, %v230, %v324
        %v328 = vsel %vm240, 0, %v326
        %v329 = vcosq.f32.pop %v327
        %v330 = vsinq.f32.pop %v327
        %vm331 = vweird.f32 %v230
        %v332 = vadd.s32 %v328, 3
        %v333 = vand.u32 %v332, 3
        %vm334 = vcmp.lt.s32.totalorder %v333, 2
        %vm335 = vcmp.eq.s32.totalorder %v333, 0
        %v336 = vxor.u32 %v330, 2147483648
        %v337 = vsel %vm335, %v329, %v336
        %vm338 = vcmp.eq.s32.totalorder %v333, 2
        %v339 = vxor.u32 %v329, 2147483648
        %v340 = vsel %vm338, %v339, %v330
        %v341 = vsel %vm334, %v337, %v340
        %v342 = vsel %vm331, nan, %v341
        %v343 = vand.u32 2147483647, %v231
        %vm344 = vcmp.le.f32.partialorder %v343, 0.7853982
        %vm345 = vcmp.lt.s32.totalorder %v231, 0
        %v346 = vand.u32 %v231, 2139095040
        %v347 = vshrl.u32 %v346, 23
        %v348 = vsub.s32 %v347, 127
        %v349 = vand.u32 2147483647, %v231
        %v350 = vand.u32 %v349, 8388607
        %v351 = vor.u32 %v350, 8388608
        %v352 = vsub.s32 0, %v351
        %v353 = vadd.s32 %v348, 1
        %vm354 = vcmp.gt.s32.totalorder %v353, 0
        %v355 = vsel %vm354, %v353, 0
        %v356 = vshrl.u32 %v355, 5
        %v357 = vand.u32 %v355, 31
        %v358 = vsub.s32 32, %v357
        %v359 = vshrl.u32 683565275, %v358
        %v360 = vshll.u32 683565275, %v357
        %v361 = vshrl.u32 2475754826, %v358
        %v362 = vor.u32 %v360, %v361
        %v363 = vshll.u32 2475754826, %v357
        %v364 = vshrl.u32 2131351028, %v358
        %v365 = vor.u32 %v363, %v364
        %v366 = vshll.u32 2131351028, %v357
        %v367 = vshrl.u32 2102212464, %v358
        %v368 = vor.u32 %v366, %v367
        %v369 = vshll.u32 2102212464, %v357
        %v370 = vshrl.u32 920167782, %v358
        %v371 = vor.u32 %v369, %v370
        %v372 = vshll.u32 920167782, %v357
        %v373 = vshrl.u32 1326507024, %v358
        %v374 = vor.u32 %v372, %v373
        %vm375 = vcmp.lt.s32.totalorder %v356, 1
        %vm376 = vcmp.lt.s32.totalorder %v356, 2
        %vm377 = vcmp.lt.s32.totalorder %v356, 3
        %vm378 = vcmp.lt.s32.totalorder %v356, 4
        %v379 = vsel %vm375, %v359, %v362
        %v380 = vsel %vm378, %v368, 2102212464
        %v381 = vsel %vm377, %v365, %v380
        %v382 = vsel %vm376, %v379, %v381
        %v383 = vsel %vm375, %v362, %v365
        %v384 = vsel %vm378, %v371, 920167782
        %v385 = vsel %vm377, %v368, %v384
        %v386 = vsel %vm376, %v383, %v385
        %v387 = vsel %vm375, %v365, %v368
        %v388 = vsel %vm378, %v374, 1326507024
        %v389 = vsel %vm377, %v371, %v388
        %v390 = vsel %vm376, %v387, %v389
        %v391 = vshll.u32 %v351, 8
        %v392 = vmul.u32.u64.compose %v391, %v390
        %v393 = vextract.low.u32 %v392
        %v394 = vextract.high.u32 %v392
        %v395 = vmul.u32.u64.compose %v391, %v386
        %v396 = vextract.low.u32 %v395
        %v397 = vextract.high.u32 %v395
        %v398 = vmul.u32 %v391, %v382
        %v399 = vadd.s32 %v394, %v396
        %vm400 = vc.u32 %v394, %v396
        %v401 = vadd.s32 %v397, 1
        %v402 = vsel %vm400, %v401, %v397
        %v403 = vadd.s32 %v398, %v402
        %v404 = vadd.s32 %v403, 536870912
        %v405 = vshrl.u32 %v404, 30
        %v406 = vshll.u32 %v405, 30
        %v407 = vsub.s32 %v403, %v406
        %vm408 = vcmp.lt.s32.totalorder %v407, 0
        %v409 = vsub.s32 0, %v407
        %v410 = vsel %vm408, %v409, %v407
        %v411 = vclz %v410
        %v412 = vsub.s32 %v411, 2
        %vm413 = vcmp.gt.s32.totalorder 0, %v412
        %v414 = vsel %vm413, 0, %v412
        %v415 = vsub.s32 32, %v414
        %v416 = vshll.u32 %v407, %v414
        %v417 = vshrl.u32 %v399, %v415
        %v418 = vor.u32 %v416, %v417
        %v419 = vsub.s32 4294967266, %v414
        %v420 = vadd.s32 %v419, 127
        %v421 = vshll.u32 %v420, 23
        %v422 = vor.u32 4788187, %v421
        %v423 = vand.u32 2147483647, %v422
        %v425 = vcvt.s32.f32 %v418
        %v426 = vmul.f32 %v425, %v423
        %v427 = vxor.u32 %v426, 2147483648
        %v428 = vsel %vm345, %v427, %v426
        %v429 = vsub.s32 4, %v405
        %v430 = vsel %vm345, %v429, %v405
        %v431 = vsel %vm344, %v231, %v428
        %v432 = vsel %vm344, 0, %v430
        %v433 = vcosq.f32.pop %v431
        %v434 = vsinq.f32.pop %v431
        %vm435 = vweird.f32 %v231
        %v436 = vadd.s32 %v432, 3
        %v437 = vand.u32 %v436, 3
        %vm438 = vcmp.lt.s32.totalorder %v437, 2
        %vm439 = vcmp.eq.s32.totalorder %v437, 0
        %v440 = vxor.u32 %v434, 2147483648
        %v441 = vsel %vm439, %v433, %v440
        %vm442 = vcmp.eq.s32.totalorder %v437, 2
        %v443 = vxor.u32 %v433, 2147483648
        %v444 = vsel %vm442, %v443, %v434
        %v445 = vsel %vm438, %v441, %v444
        %v446 = vsel %vm435, nan, %v445
        %v447 = vand.u32 2147483647, %v232
        %vm448 = vcmp.le.f32.partialorder %v447, 0.7853982
        %vm449 = vcmp.lt.s32.totalorder %v232, 0
        %v450 = vand.u32 %v232, 2139095040
        %v451 = vshrl.u32 %v450, 23
        %v452 = vsub.s32 %v451, 127
        %v453 = vand.u32 2147483647, %v232
        %v454 = vand.u32 %v453, 8388607
        %v455 = vor.u32 %v454, 8388608
        %v456 = vsub.s32 0, %v455
        %v457 = vadd.s32 %v452, 1
        %vm458 = vcmp.gt.s32.totalorder %v457, 0
        %v459 = vsel %vm458, %v457, 0
        %v460 = vshrl.u32 %v459, 5
        %v461 = vand.u32 %v459, 31
        %v462 = vsub.s32 32, %v461
        %v463 = vshrl.u32 683565275, %v462
        %v464 = vshll.u32 683565275, %v461
        %v465 = vshrl.u32 2475754826, %v462
        %v466 = vor.u32 %v464, %v465
        %v467 = vshll.u32 2475754826, %v461
        %v468 = vshrl.u32 2131351028, %v462
        %v469 = vor.u32 %v467, %v468
        %v470 = vshll.u32 2131351028, %v461
        %v471 = vshrl.u32 2102212464, %v462
        %v472 = vor.u32 %v470, %v471
        %v473 = vshll.u32 2102212464, %v461
        %v474 = vshrl.u32 920167782, %v462
        %v475 = vor.u32 %v473, %v474
        %v476 = vshll.u32 920167782, %v461
        %v477 = vshrl.u32 1326507024, %v462
        %v478 = vor.u32 %v476, %v477
        %vm479 = vcmp.lt.s32.totalorder %v460, 1
        %vm480 = vcmp.lt.s32.totalorder %v460, 2
        %vm481 = vcmp.lt.s32.totalorder %v460, 3
        %vm482 = vcmp.lt.s32.totalorder %v460, 4
        %v483 = vsel %vm479, %v463, %v466
        %v484 = vsel %vm482, %v472, 2102212464
        %v485 = vsel %vm481, %v469, %v484
        %v486 = vsel %vm480, %v483, %v485
        %v487 = vsel %vm479, %v466, %v469
        %v488 = vsel %vm482, %v475, 920167782
        %v489 = vsel %vm481, %v472, %v488
        %v490 = vsel %vm480, %v487, %v489
        %v491 = vsel %vm479, %v469, %v472
        %v492 = vsel %vm482, %v478, 1326507024
        %v493 = vsel %vm481, %v475, %v492
        %v494 = vsel %vm480, %v491, %v493
        %v495 = vshll.u32 %v455, 8
        %v496 = vmul.u32.u64.compose %v495, %v494
        %v497 = vextract.low.u32 %v496
        %v498 = vextract.high.u32 %v496
        %v499 = vmul.u32.u64.compose %v495, %v490
        %v500 = vextract.low.u32 %v499
        %v501 = vextract.high.u32 %v499
        %v502 = vmul.u32 %v495, %v486
        %v503 = vadd.s32 %v498, %v500
        %vm504 = vc.u32 %v498, %v500
        %v505 = vadd.s32 %v501, 1
        %v506 = vsel %vm504, %v505, %v501
        %v507 = vadd.s32 %v502, %v506
        %v508 = vadd.s32 %v507, 536870912
        %v509 = vshrl.u32 %v508, 30
        %v510 = vshll.u32 %v509, 30
        %v511 = vsub.s32 %v507, %v510
        %vm512 = vcmp.lt.s32.totalorder %v511, 0
        %v513 = vsub.s32 0, %v511
        %v514 = vsel %vm512, %v513, %v511
        %v515 = vclz %v514
        %v516 = vsub.s32 %v515, 2
        %vm517 = vcmp.gt.s32.totalorder 0, %v516
        %v518 = vsel %vm517, 0, %v516
        %v519 = vsub.s32 32, %v518
        %v520 = vshll.u32 %v511, %v518
        %v521 = vshrl.u32 %v503, %v519
        %v522 = vor.u32 %v520, %v521
        %v523 = vsub.s32 4294967266, %v518
        %v524 = vadd.s32 %v523, 127
        %v525 = vshll.u32 %v524, 23
        %v526 = vor.u32 4788187, %v525
        %v527 = vand.u32 2147483647, %v526
        %v529 = vcvt.s32.f32 %v522
        %v530 = vmul.f32 %v529, %v527
        %v531 = vxor.u32 %v530, 2147483648
        %v532 = vsel %vm449, %v531, %v530
        %v533 = vsub.s32 4, %v509
        %v534 = vsel %vm449, %v533, %v509
        %v535 = vsel %vm448, %v232, %v532
        %v536 = vsel %vm448, 0, %v534
        %v537 = vcosq.f32.pop %v535
        %v538 = vsinq.f32.pop %v535
        %vm539 = vweird.f32 %v232
        %v540 = vadd.s32 %v536, 3
        %v541 = vand.u32 %v540, 3
        %vm542 = vcmp.lt.s32.totalorder %v541, 2
        %vm543 = vcmp.eq.s32.totalorder %v541, 0
        %v544 = vxor.u32 %v538, 2147483648
        %v545 = vsel %vm543, %v537, %v544
        %vm546 = vcmp.eq.s32.totalorder %v541, 2
        %v547 = vxor.u32 %v537, 2147483648
        %v548 = vsel %vm546, %v547, %v538
        %v549 = vsel %vm542, %v545, %v548
        %v550 = vsel %vm539, nan, %v549
        %v551 = vand.u32 2147483647, %v233
        %vm552 = vcmp.le.f32.partialorder %v551, 0.7853982
        %vm553 = vcmp.lt.s32.totalorder %v233, 0
        %v554 = vand.u32 %v233, 2139095040
        %v555 = vshrl.u32 %v554, 23
        %v556 = vsub.s32 %v555, 127
        %v557 = vand.u32 2147483647, %v233
        %v558 = vand.u32 %v557, 8388607
        %v559 = vor.u32 %v558, 8388608
        %v560 = vsub.s32 0, %v559
        %v561 = vadd.s32 %v556, 1
        %vm562 = vcmp.gt.s32.totalorder %v561, 0
        %v563 = vsel %vm562, %v561, 0
        %v564 = vshrl.u32 %v563, 5
        %v565 = vand.u32 %v563, 31
        %v566 = vsub.s32 32, %v565
        %v567 = vshrl.u32 683565275, %v566
        %v568 = vshll.u32 683565275, %v565
        %v569 = vshrl.u32 2475754826, %v566
        %v570 = vor.u32 %v568, %v569
        %v571 = vshll.u32 2475754826, %v565
        %v572 = vshrl.u32 2131351028, %v566
        %v573 = vor.u32 %v571, %v572
        %v574 = vshll.u32 2131351028, %v565
        %v575 = vshrl.u32 2102212464, %v566
        %v576 = vor.u32 %v574, %v575
        %v577 = vshll.u32 2102212464, %v565
        %v578 = vshrl.u32 920167782, %v566
        %v579 = vor.u32 %v577, %v578
        %v580 = vshll.u32 920167782, %v565
        %v581 = vshrl.u32 1326507024, %v566
        %v582 = vor.u32 %v580, %v581
        %vm583 = vcmp.lt.s32.totalorder %v564, 1
        %vm584 = vcmp.lt.s32.totalorder %v564, 2
        %vm585 = vcmp.lt.s32.totalorder %v564, 3
        %vm586 = vcmp.lt.s32.totalorder %v564, 4
        %v587 = vsel %vm583, %v567, %v570
        %v588 = vsel %vm586, %v576, 2102212464
        %v589 = vsel %vm585, %v573, %v588
        %v590 = vsel %vm584, %v587, %v589
        %v591 = vsel %vm583, %v570, %v573
        %v592 = vsel %vm586, %v579, 920167782
        %v593 = vsel %vm585, %v576, %v592
        %v594 = vsel %vm584, %v591, %v593
        %v595 = vsel %vm583, %v573, %v576
        %v596 = vsel %vm586, %v582, 1326507024
        %v597 = vsel %vm585, %v579, %v596
        %v598 = vsel %vm584, %v595, %v597
        %v599 = vshll.u32 %v559, 8
        %v600 = vmul.u32.u64.compose %v599, %v598
        %v601 = vextract.low.u32 %v600
        %v602 = vextract.high.u32 %v600
        %v603 = vmul.u32.u64.compose %v599, %v594
        %v604 = vextract.low.u32 %v603
        %v605 = vextract.high.u32 %v603
        %v606 = vmul.u32 %v599, %v590
        %v607 = vadd.s32 %v602, %v604
        %vm608 = vc.u32 %v602, %v604
        %v609 = vadd.s32 %v605, 1
        %v610 = vsel %vm608, %v609, %v605
        %v611 = vadd.s32 %v606, %v610
        %v612 = vadd.s32 %v611, 536870912
        %v613 = vshrl.u32 %v612, 30
        %v614 = vshll.u32 %v613, 30
        %v615 = vsub.s32 %v611, %v614
        %vm616 = vcmp.lt.s32.totalorder %v615, 0
        %v617 = vsub.s32 0, %v615
        %v618 = vsel %vm616, %v617, %v615
        %v619 = vclz %v618
        %v620 = vsub.s32 %v619, 2
        %vm621 = vcmp.gt.s32.totalorder 0, %v620
        %v622 = vsel %vm621, 0, %v620
        %v623 = vsub.s32 32, %v622
        %v624 = vshll.u32 %v615, %v622
        %v625 = vshrl.u32 %v607, %v623
        %v626 = vor.u32 %v624, %v625
        %v627 = vsub.s32 4294967266, %v622
        %v628 = vadd.s32 %v627, 127
        %v629 = vshll.u32 %v628, 23
        %v630 = vor.u32 4788187, %v629
        %v631 = vand.u32 2147483647, %v630
        %v633 = vcvt.s32.f32 %v626
        %v634 = vmul.f32 %v633, %v631
        %v635 = vxor.u32 %v634, 2147483648
        %v636 = vsel %vm553, %v635, %v634
        %v637 = vsub.s32 4, %v613
        %v638 = vsel %vm553, %v637, %v613
        %v639 = vsel %vm552, %v233, %v636
        %v640 = vsel %vm552, 0, %v638
        %v641 = vcosq.f32.pop %v639
        %v642 = vsinq.f32.pop %v639
        %vm643 = vweird.f32 %v233
        %v644 = vadd.s32 %v640, 3
        %v645 = vand.u32 %v644, 3
        %vm646 = vcmp.lt.s32.totalorder %v645, 2
        %vm647 = vcmp.eq.s32.totalorder %v645, 0
        %v648 = vxor.u32 %v642, 2147483648
        %v649 = vsel %vm647, %v641, %v648
        %vm650 = vcmp.eq.s32.totalorder %v645, 2
        %v651 = vxor.u32 %v641, 2147483648
        %v652 = vsel %vm650, %v651, %v642
        %v653 = vsel %vm646, %v649, %v652
        %v654 = vsel %vm643, nan, %v653
        %v655 = vand.u32 2147483647, %v234
        %vm656 = vcmp.le.f32.partialorder %v655, 0.7853982
        %vm657 = vcmp.lt.s32.totalorder %v234, 0
        %v658 = vand.u32 %v234, 2139095040
        %v659 = vshrl.u32 %v658, 23
        %v660 = vsub.s32 %v659, 127
        %v661 = vand.u32 2147483647, %v234
        %v662 = vand.u32 %v661, 8388607
        %v663 = vor.u32 %v662, 8388608
        %v664 = vsub.s32 0, %v663
        %v665 = vadd.s32 %v660, 1
        %vm666 = vcmp.gt.s32.totalorder %v665, 0
        %v667 = vsel %vm666, %v665, 0
        %v668 = vshrl.u32 %v667, 5
        %v669 = vand.u32 %v667, 31
        %v670 = vsub.s32 32, %v669
        %v671 = vshrl.u32 683565275, %v670
        %v672 = vshll.u32 683565275, %v669
        %v673 = vshrl.u32 2475754826, %v670
        %v674 = vor.u32 %v672, %v673
        %v675 = vshll.u32 2475754826, %v669
        %v676 = vshrl.u32 2131351028, %v670
        %v677 = vor.u32 %v675, %v676
        %v678 = vshll.u32 2131351028, %v669
        %v679 = vshrl.u32 2102212464, %v670
        %v680 = vor.u32 %v678, %v679
        %v681 = vshll.u32 2102212464, %v669
        %v682 = vshrl.u32 920167782, %v670
        %v683 = vor.u32 %v681, %v682
        %v684 = vshll.u32 920167782, %v669
        %v685 = vshrl.u32 1326507024, %v670
        %v686 = vor.u32 %v684, %v685
        %vm687 = vcmp.lt.s32.totalorder %v668, 1
        %vm688 = vcmp.lt.s32.totalorder %v668, 2
        %vm689 = vcmp.lt.s32.totalorder %v668, 3
        %vm690 = vcmp.lt.s32.totalorder %v668, 4
        %v691 = vsel %vm687, %v671, %v674
        %v692 = vsel %vm690, %v680, 2102212464
        %v693 = vsel %vm689, %v677, %v692
        %v694 = vsel %vm688, %v691, %v693
        %v695 = vsel %vm687, %v674, %v677
        %v696 = vsel %vm690, %v683, 920167782
        %v697 = vsel %vm689, %v680, %v696
        %v698 = vsel %vm688, %v695, %v697
        %v699 = vsel %vm687, %v677, %v680
        %v700 = vsel %vm690, %v686, 1326507024
        %v701 = vsel %vm689, %v683, %v700
        %v702 = vsel %vm688, %v699, %v701
        %v703 = vshll.u32 %v663, 8
        %v704 = vmul.u32.u64.compose %v703, %v702
        %v705 = vextract.low.u32 %v704
        %v706 = vextract.high.u32 %v704
        %v707 = vmul.u32.u64.compose %v703, %v698
        %v708 = vextract.low.u32 %v707
        %v709 = vextract.high.u32 %v707
        %v710 = vmul.u32 %v703, %v694
        %v711 = vadd.s32 %v706, %v708
        %vm712 = vc.u32 %v706, %v708
        %v713 = vadd.s32 %v709, 1
        %v714 = vsel %vm712, %v713, %v709
        %v715 = vadd.s32 %v710, %v714
        %v716 = vadd.s32 %v715, 536870912
        %v717 = vshrl.u32 %v716, 30
        %v718 = vshll.u32 %v717, 30
        %v719 = vsub.s32 %v715, %v718
        %vm720 = vcmp.lt.s32.totalorder %v719, 0
        %v721 = vsub.s32 0, %v719
        %v722 = vsel %vm720, %v721, %v719
        %v723 = vclz %v722
        %v724 = vsub.s32 %v723, 2
        %vm725 = vcmp.gt.s32.totalorder 0, %v724
        %v726 = vsel %vm725, 0, %v724
        %v727 = vsub.s32 32, %v726
        %v728 = vshll.u32 %v719, %v726
        %v729 = vshrl.u32 %v711, %v727
        %v730 = vor.u32 %v728, %v729
        %v731 = vsub.s32 4294967266, %v726
        %v732 = vadd.s32 %v731, 127
        %v733 = vshll.u32 %v732, 23
        %v734 = vor.u32 4788187, %v733
        %v735 = vand.u32 2147483647, %v734
        %v737 = vcvt.s32.f32 %v730
        %v738 = vmul.f32 %v737, %v735
        %v739 = vxor.u32 %v738, 2147483648
        %v740 = vsel %vm657, %v739, %v738
        %v741 = vsub.s32 4, %v717
        %v742 = vsel %vm657, %v741, %v717
        %v743 = vsel %vm656, %v234, %v740
        %v744 = vsel %vm656, 0, %v742
        %v745 = vcosq.f32.pop %v743
        %v746 = vsinq.f32.pop %v743
        %vm747 = vweird.f32 %v234
        %v748 = vadd.s32 %v744, 3
        %v749 = vand.u32 %v748, 3
        %vm750 = vcmp.lt.s32.totalorder %v749, 2
        %vm751 = vcmp.eq.s32.totalorder %v749, 0
        %v752 = vxor.u32 %v746, 2147483648
        %v753 = vsel %vm751, %v745, %v752
        %vm754 = vcmp.eq.s32.totalorder %v749, 2
        %v755 = vxor.u32 %v745, 2147483648
        %v756 = vsel %vm754, %v755, %v746
        %v757 = vsel %vm750, %v753, %v756
        %v758 = vsel %vm747, nan, %v757
        %v759 = vand.u32 2147483647, %v235
        %vm760 = vcmp.le.f32.partialorder %v759, 0.7853982
        %vm761 = vcmp.lt.s32.totalorder %v235, 0
        %v762 = vand.u32 %v235, 2139095040
        %v763 = vshrl.u32 %v762, 23
        %v764 = vsub.s32 %v763, 127
        %v765 = vand.u32 2147483647, %v235
        %v766 = vand.u32 %v765, 8388607
        %v767 = vor.u32 %v766, 8388608
        %v768 = vsub.s32 0, %v767
        %v769 = vadd.s32 %v764, 1
        %vm770 = vcmp.gt.s32.totalorder %v769, 0
        %v771 = vsel %vm770, %v769, 0
        %v772 = vshrl.u32 %v771, 5
        %v773 = vand.u32 %v771, 31
        %v774 = vsub.s32 32, %v773
        %v775 = vshrl.u32 683565275, %v774
        %v776 = vshll.u32 683565275, %v773
        %v777 = vshrl.u32 2475754826, %v774
        %v778 = vor.u32 %v776, %v777
        %v779 = vshll.u32 2475754826, %v773
        %v780 = vshrl.u32 2131351028, %v774
        %v781 = vor.u32 %v779, %v780
        %v782 = vshll.u32 2131351028, %v773
        %v783 = vshrl.u32 2102212464, %v774
        %v784 = vor.u32 %v782, %v783
        %v785 = vshll.u32 2102212464, %v773
        %v786 = vshrl.u32 920167782, %v774
        %v787 = vor.u32 %v785, %v786
        %v788 = vshll.u32 920167782, %v773
        %v789 = vshrl.u32 1326507024, %v774
        %v790 = vor.u32 %v788, %v789
        %vm791 = vcmp.lt.s32.totalorder %v772, 1
        %vm792 = vcmp.lt.s32.totalorder %v772, 2
        %vm793 = vcmp.lt.s32.totalorder %v772, 3
        %vm794 = vcmp.lt.s32.totalorder %v772, 4
        %v795 = vsel %vm791, %v775, %v778
        %v796 = vsel %vm794, %v784, 2102212464
        %v797 = vsel %vm793, %v781, %v796
        %v798 = vsel %vm792, %v795, %v797
        %v799 = vsel %vm791, %v778, %v781
        %v800 = vsel %vm794, %v787, 920167782
        %v801 = vsel %vm793, %v784, %v800
        %v802 = vsel %vm792, %v799, %v801
        %v803 = vsel %vm791, %v781, %v784
        %v804 = vsel %vm794, %v790, 1326507024
        %v805 = vsel %vm793, %v787, %v804
        %v806 = vsel %vm792, %v803, %v805
        %v807 = vshll.u32 %v767, 8
        %v808 = vmul.u32.u64.compose %v807, %v806
        %v809 = vextract.low.u32 %v808
        %v810 = vextract.high.u32 %v808
        %v811 = vmul.u32.u64.compose %v807, %v802
        %v812 = vextract.low.u32 %v811
        %v813 = vextract.high.u32 %v811
        %v814 = vmul.u32 %v807, %v798
        %v815 = vadd.s32 %v810, %v812
        %vm816 = vc.u32 %v810, %v812
        %v817 = vadd.s32 %v813, 1
        %v818 = vsel %vm816, %v817, %v813
        %v819 = vadd.s32 %v814, %v818
        %v820 = vadd.s32 %v819, 536870912
        %v821 = vshrl.u32 %v820, 30
        %v822 = vshll.u32 %v821, 30
        %v823 = vsub.s32 %v819, %v822
        %vm824 = vcmp.lt.s32.totalorder %v823, 0
        %v825 = vsub.s32 0, %v823
        %v826 = vsel %vm824, %v825, %v823
        %v827 = vclz %v826
        %v828 = vsub.s32 %v827, 2
        %vm829 = vcmp.gt.s32.totalorder 0, %v828
        %v830 = vsel %vm829, 0, %v828
        %v831 = vsub.s32 32, %v830
        %v832 = vshll.u32 %v823, %v830
        %v833 = vshrl.u32 %v815, %v831
        %v834 = vor.u32 %v832, %v833
        %v835 = vsub.s32 4294967266, %v830
        %v836 = vadd.s32 %v835, 127
        %v837 = vshll.u32 %v836, 23
        %v838 = vor.u32 4788187, %v837
        %v839 = vand.u32 2147483647, %v838
        %v841 = vcvt.s32.f32 %v834
        %v842 = vmul.f32 %v841, %v839
        %v843 = vxor.u32 %v842, 2147483648
        %v844 = vsel %vm761, %v843, %v842
        %v845 = vsub.s32 4, %v821
        %v846 = vsel %vm761, %v845, %v821
        %v847 = vsel %vm760, %v235, %v844
        %v848 = vsel %vm760, 0, %v846
        %v849 = vcosq.f32.pop %v847
        %v850 = vsinq.f32.pop %v847
        %vm851 = vweird.f32 %v235
        %v852 = vadd.s32 %v848, 3
        %v853 = vand.u32 %v852, 3
        %vm854 = vcmp.lt.s32.totalorder %v853, 2
        %vm855 = vcmp.eq.s32.totalorder %v853, 0
        %v856 = vxor.u32 %v850, 2147483648
        %v857 = vsel %vm855, %v849, %v856
        %vm858 = vcmp.eq.s32.totalorder %v853, 2
        %v859 = vxor.u32 %v849, 2147483648
        %v860 = vsel %vm858, %v859, %v850
        %v861 = vsel %vm854, %v857, %v860
        %v862 = vsel %vm851, nan, %v861
        %v863 = vand.u32 2147483647, %v236
        %vm864 = vcmp.le.f32.partialorder %v863, 0.7853982
        %vm865 = vcmp.lt.s32.totalorder %v236, 0
        %v866 = vand.u32 %v236, 2139095040
        %v867 = vshrl.u32 %v866, 23
        %v868 = vsub.s32 %v867, 127
        %v869 = vand.u32 2147483647, %v236
        %v870 = vand.u32 %v869, 8388607
        %v871 = vor.u32 %v870, 8388608
        %v872 = vsub.s32 0, %v871
        %v873 = vadd.s32 %v868, 1
        %vm874 = vcmp.gt.s32.totalorder %v873, 0
        %v875 = vsel %vm874, %v873, 0
        %v876 = vshrl.u32 %v875, 5
        %v877 = vand.u32 %v875, 31
        %v878 = vsub.s32 32, %v877
        %v879 = vshrl.u32 683565275, %v878
        %v880 = vshll.u32 683565275, %v877
        %v881 = vshrl.u32 2475754826, %v878
        %v882 = vor.u32 %v880, %v881
        %v883 = vshll.u32 2475754826, %v877
        %v884 = vshrl.u32 2131351028, %v878
        %v885 = vor.u32 %v883, %v884
        %v886 = vshll.u32 2131351028, %v877
        %v887 = vshrl.u32 2102212464, %v878
        %v888 = vor.u32 %v886, %v887
        %v889 = vshll.u32 2102212464, %v877
        %v890 = vshrl.u32 920167782, %v878
        %v891 = vor.u32 %v889, %v890
        %v892 = vshll.u32 920167782, %v877
        %v893 = vshrl.u32 1326507024, %v878
        %v894 = vor.u32 %v892, %v893
        %vm895 = vcmp.lt.s32.totalorder %v876, 1
        %vm896 = vcmp.lt.s32.totalorder %v876, 2
        %vm897 = vcmp.lt.s32.totalorder %v876, 3
        %vm898 = vcmp.lt.s32.totalorder %v876, 4
        %v899 = vsel %vm895, %v879, %v882
        %v900 = vsel %vm898, %v888, 2102212464
        %v901 = vsel %vm897, %v885, %v900
        %v902 = vsel %vm896, %v899, %v901
        %v903 = vsel %vm895, %v882, %v885
        %v904 = vsel %vm898, %v891, 920167782
        %v905 = vsel %vm897, %v888, %v904
        %v906 = vsel %vm896, %v903, %v905
        %v907 = vsel %vm895, %v885, %v888
        %v908 = vsel %vm898, %v894, 1326507024
        %v909 = vsel %vm897, %v891, %v908
        %v910 = vsel %vm896, %v907, %v909
        %v911 = vshll.u32 %v871, 8
        %v912 = vmul.u32.u64.compose %v911, %v910
        %v913 = vextract.low.u32 %v912
        %v914 = vextract.high.u32 %v912
        %v915 = vmul.u32.u64.compose %v911, %v906
        %v916 = vextract.low.u32 %v915
        %v917 = vextract.high.u32 %v915
        %v918 = vmul.u32 %v911, %v902
        %v919 = vadd.s32 %v914, %v916
        %vm920 = vc.u32 %v914, %v916
        %v921 = vadd.s32 %v917, 1
        %v922 = vsel %vm920, %v921, %v917
        %v923 = vadd.s32 %v918, %v922
        %v924 = vadd.s32 %v923, 536870912
        %v925 = vshrl.u32 %v924, 30
        %v926 = vshll.u32 %v925, 30
        %v927 = vsub.s32 %v923, %v926
        %vm928 = vcmp.lt.s32.totalorder %v927, 0
        %v929 = vsub.s32 0, %v927
        %v930 = vsel %vm928, %v929, %v927
        %v931 = vclz %v930
        %v932 = vsub.s32 %v931, 2
        %vm933 = vcmp.gt.s32.totalorder 0, %v932
        %v934 = vsel %vm933, 0, %v932
        %v935 = vsub.s32 32, %v934
        %v936 = vshll.u32 %v927, %v934
        %v937 = vshrl.u32 %v919, %v935
        %v938 = vor.u32 %v936, %v937
        %v939 = vsub.s32 4294967266, %v934
        %v940 = vadd.s32 %v939, 127
        %v941 = vshll.u32 %v940, 23
        %v942 = vor.u32 4788187, %v941
        %v943 = vand.u32 2147483647, %v942
        %v945 = vcvt.s32.f32 %v938
        %v946 = vmul.f32 %v945, %v943
        %v947 = vxor.u32 %v946, 2147483648
        %v948 = vsel %vm865, %v947, %v946
        %v949 = vsub.s32 4, %v925
        %v950 = vsel %vm865, %v949, %v925
        %v951 = vsel %vm864, %v236, %v948
        %v952 = vsel %vm864, 0, %v950
        %v953 = vcosq.f32.pop %v951
        %v954 = vsinq.f32.pop %v951
        %vm955 = vweird.f32 %v236
        %v956 = vadd.s32 %v952, 3
        %v957 = vand.u32 %v956, 3
        %vm958 = vcmp.lt.s32.totalorder %v957, 2
        %vm959 = vcmp.eq.s32.totalorder %v957, 0
        %v960 = vxor.u32 %v954, 2147483648
        %v961 = vsel %vm959, %v953, %v960
        %vm962 = vcmp.eq.s32.totalorder %v957, 2
        %v963 = vxor.u32 %v953, 2147483648
        %v964 = vsel %vm962, %v963, %v954
        %v965 = vsel %vm958, %v961, %v964
        %v966 = vsel %vm955, nan, %v965
        %v967 = vand.u32 2147483647, %v237
        %vm968 = vcmp.le.f32.partialorder %v967, 0.7853982
        %vm969 = vcmp.lt.s32.totalorder %v237, 0
        %v970 = vand.u32 %v237, 2139095040
        %v971 = vshrl.u32 %v970, 23
        %v972 = vsub.s32 %v971, 127
        %v973 = vand.u32 2147483647, %v237
        %v974 = vand.u32 %v973, 8388607
        %v975 = vor.u32 %v974, 8388608
        %v976 = vsub.s32 0, %v975
        %v977 = vadd.s32 %v972, 1
        %vm978 = vcmp.gt.s32.totalorder %v977, 0
        %v979 = vsel %vm978, %v977, 0
        %v980 = vshrl.u32 %v979, 5
        %v981 = vand.u32 %v979, 31
        %v982 = vsub.s32 32, %v981
        %v983 = vshrl.u32 683565275, %v982
        %v984 = vshll.u32 683565275, %v981
        %v985 = vshrl.u32 2475754826, %v982
        %v986 = vor.u32 %v984, %v985
        %v987 = vshll.u32 2475754826, %v981
        %v988 = vshrl.u32 2131351028, %v982
        %v989 = vor.u32 %v987, %v988
        %v990 = vshll.u32 2131351028, %v981
        %v991 = vshrl.u32 2102212464, %v982
        %v992 = vor.u32 %v990, %v991
        %v993 = vshll.u32 2102212464, %v981
        %v994 = vshrl.u32 920167782, %v982
        %v995 = vor.u32 %v993, %v994
        %v996 = vshll.u32 920167782, %v981
        %v997 = vshrl.u32 1326507024, %v982
        %v998 = vor.u32 %v996, %v997
        %vm999 = vcmp.lt.s32.totalorder %v980, 1
        %vm1000 = vcmp.lt.s32.totalorder %v980, 2
        %vm1001 = vcmp.lt.s32.totalorder %v980, 3
        %vm1002 = vcmp.lt.s32.totalorder %v980, 4
        %v1003 = vsel %vm999, %v983, %v986
        %v1004 = vsel %vm1002, %v992, 2102212464
        %v1005 = vsel %vm1001, %v989, %v1004
        %v1006 = vsel %vm1000, %v1003, %v1005
        %v1007 = vsel %vm999, %v986, %v989
        %v1008 = vsel %vm1002, %v995, 920167782
        %v1009 = vsel %vm1001, %v992, %v1008
        %v1010 = vsel %vm1000, %v1007, %v1009
        %v1011 = vsel %vm999, %v989, %v992
        %v1012 = vsel %vm1002, %v998, 1326507024
        %v1013 = vsel %vm1001, %v995, %v1012
        %v1014 = vsel %vm1000, %v1011, %v1013
        %v1015 = vshll.u32 %v975, 8
        %v1016 = vmul.u32.u64.compose %v1015, %v1014
        %v1017 = vextract.low.u32 %v1016
        %v1018 = vextract.high.u32 %v1016
        %v1019 = vmul.u32.u64.compose %v1015, %v1010
        %v1020 = vextract.low.u32 %v1019
        %v1021 = vextract.high.u32 %v1019
        %v1022 = vmul.u32 %v1015, %v1006
        %v1023 = vadd.s32 %v1018, %v1020
        %vm1024 = vc.u32 %v1018, %v1020
        %v1025 = vadd.s32 %v1021, 1
        %v1026 = vsel %vm1024, %v1025, %v1021
        %v1027 = vadd.s32 %v1022, %v1026
        %v1028 = vadd.s32 %v1027, 536870912
        %v1029 = vshrl.u32 %v1028, 30
        %v1030 = vshll.u32 %v1029, 30
        %v1031 = vsub.s32 %v1027, %v1030
        %vm1032 = vcmp.lt.s32.totalorder %v1031, 0
        %v1033 = vsub.s32 0, %v1031
        %v1034 = vsel %vm1032, %v1033, %v1031
        %v1035 = vclz %v1034
        %v1036 = vsub.s32 %v1035, 2
        %vm1037 = vcmp.gt.s32.totalorder 0, %v1036
        %v1038 = vsel %vm1037, 0, %v1036
        %v1039 = vsub.s32 32, %v1038
        %v1040 = vshll.u32 %v1031, %v1038
        %v1041 = vshrl.u32 %v1023, %v1039
        %v1042 = vor.u32 %v1040, %v1041
        %v1043 = vsub.s32 4294967266, %v1038
        %v1044 = vadd.s32 %v1043, 127
        %v1045 = vshll.u32 %v1044, 23
        %v1046 = vor.u32 4788187, %v1045
        %v1047 = vand.u32 2147483647, %v1046
        %v1049 = vcvt.s32.f32 %v1042
        %v1050 = vmul.f32 %v1049, %v1047
        %v1051 = vxor.u32 %v1050, 2147483648
        %v1052 = vsel %vm969, %v1051, %v1050
        %v1053 = vsub.s32 4, %v1029
        %v1054 = vsel %vm969, %v1053, %v1029
        %v1055 = vsel %vm968, %v237, %v1052
        %v1056 = vsel %vm968, 0, %v1054
        %v1057 = vcosq.f32.pop %v1055
        %v1058 = vsinq.f32.pop %v1055
        %vm1059 = vweird.f32 %v237
        %v1060 = vadd.s32 %v1056, 3
        %v1061 = vand.u32 %v1060, 3
        %vm1062 = vcmp.lt.s32.totalorder %v1061, 2
        %vm1063 = vcmp.eq.s32.totalorder %v1061, 0
        %v1064 = vxor.u32 %v1058, 2147483648
        %v1065 = vsel %vm1063, %v1057, %v1064
        %vm1066 = vcmp.eq.s32.totalorder %v1061, 2
        %v1067 = vxor.u32 %v1057, 2147483648
        %v1068 = vsel %vm1066, %v1067, %v1058
        %v1069 = vsel %vm1062, %v1065, %v1068
        %v1070 = vsel %vm1059, nan, %v1069
        %v1071 = vand.u32 2147483647, %v238
        %vm1072 = vcmp.le.f32.partialorder %v1071, 0.7853982
        %vm1073 = vcmp.lt.s32.totalorder %v238, 0
        %v1074 = vand.u32 %v238, 2139095040
        %v1075 = vshrl.u32 %v1074, 23
        %v1076 = vsub.s32 %v1075, 127
        %v1077 = vand.u32 2147483647, %v238
        %v1078 = vand.u32 %v1077, 8388607
        %v1079 = vor.u32 %v1078, 8388608
        %v1080 = vsub.s32 0, %v1079
        %v1081 = vadd.s32 %v1076, 1
        %vm1082 = vcmp.gt.s32.totalorder %v1081, 0
        %v1083 = vsel %vm1082, %v1081, 0
        %v1084 = vshrl.u32 %v1083, 5
        %v1085 = vand.u32 %v1083, 31
        %v1086 = vsub.s32 32, %v1085
        %v1087 = vshrl.u32 683565275, %v1086
        %v1088 = vshll.u32 683565275, %v1085
        %v1089 = vshrl.u32 2475754826, %v1086
        %v1090 = vor.u32 %v1088, %v1089
        %v1091 = vshll.u32 2475754826, %v1085
        %v1092 = vshrl.u32 2131351028, %v1086
        %v1093 = vor.u32 %v1091, %v1092
        %v1094 = vshll.u32 2131351028, %v1085
        %v1095 = vshrl.u32 2102212464, %v1086
        %v1096 = vor.u32 %v1094, %v1095
        %v1097 = vshll.u32 2102212464, %v1085
        %v1098 = vshrl.u32 920167782, %v1086
        %v1099 = vor.u32 %v1097, %v1098
        %v1100 = vshll.u32 920167782, %v1085
        %v1101 = vshrl.u32 1326507024, %v1086
        %v1102 = vor.u32 %v1100, %v1101
        %vm1103 = vcmp.lt.s32.totalorder %v1084, 1
        %vm1104 = vcmp.lt.s32.totalorder %v1084, 2
        %vm1105 = vcmp.lt.s32.totalorder %v1084, 3
        %vm1106 = vcmp.lt.s32.totalorder %v1084, 4
        %v1107 = vsel %vm1103, %v1087, %v1090
        %v1108 = vsel %vm1106, %v1096, 2102212464
        %v1109 = vsel %vm1105, %v1093, %v1108
        %v1110 = vsel %vm1104, %v1107, %v1109
        %v1111 = vsel %vm1103, %v1090, %v1093
        %v1112 = vsel %vm1106, %v1099, 920167782
        %v1113 = vsel %vm1105, %v1096, %v1112
        %v1114 = vsel %vm1104, %v1111, %v1113
        %v1115 = vsel %vm1103, %v1093, %v1096
        %v1116 = vsel %vm1106, %v1102, 1326507024
        %v1117 = vsel %vm1105, %v1099, %v1116
        %v1118 = vsel %vm1104, %v1115, %v1117
        %v1119 = vshll.u32 %v1079, 8
        %v1120 = vmul.u32.u64.compose %v1119, %v1118
        %v1121 = vextract.low.u32 %v1120
        %v1122 = vextract.high.u32 %v1120
        %v1123 = vmul.u32.u64.compose %v1119, %v1114
        %v1124 = vextract.low.u32 %v1123
        %v1125 = vextract.high.u32 %v1123
        %v1126 = vmul.u32 %v1119, %v1110
        %v1127 = vadd.s32 %v1122, %v1124
        %vm1128 = vc.u32 %v1122, %v1124
        %v1129 = vadd.s32 %v1125, 1
        %v1130 = vsel %vm1128, %v1129, %v1125
        %v1131 = vadd.s32 %v1126, %v1130
        %v1132 = vadd.s32 %v1131, 536870912
        %v1133 = vshrl.u32 %v1132, 30
        %v1134 = vshll.u32 %v1133, 30
        %v1135 = vsub.s32 %v1131, %v1134
        %vm1136 = vcmp.lt.s32.totalorder %v1135, 0
        %v1137 = vsub.s32 0, %v1135
        %v1138 = vsel %vm1136, %v1137, %v1135
        %v1139 = vclz %v1138
        %v1140 = vsub.s32 %v1139, 2
        %vm1141 = vcmp.gt.s32.totalorder 0, %v1140
        %v1142 = vsel %vm1141, 0, %v1140
        %v1143 = vsub.s32 32, %v1142
        %v1144 = vshll.u32 %v1135, %v1142
        %v1145 = vshrl.u32 %v1127, %v1143
        %v1146 = vor.u32 %v1144, %v1145
        %v1147 = vsub.s32 4294967266, %v1142
        %v1148 = vadd.s32 %v1147, 127
        %v1149 = vshll.u32 %v1148, 23
        %v1150 = vor.u32 4788187, %v1149
        %v1151 = vand.u32 2147483647, %v1150
        %v1153 = vcvt.s32.f32 %v1146
        %v1154 = vmul.f32 %v1153, %v1151
        %v1155 = vxor.u32 %v1154, 2147483648
        %v1156 = vsel %vm1073, %v1155, %v1154
        %v1157 = vsub.s32 4, %v1133
        %v1158 = vsel %vm1073, %v1157, %v1133
        %v1159 = vsel %vm1072, %v238, %v1156
        %v1160 = vsel %vm1072, 0, %v1158
        %v1161 = vcosq.f32.pop %v1159
        %v1162 = vsinq.f32.pop %v1159
        %vm1163 = vweird.f32 %v238
        %v1164 = vadd.s32 %v1160, 3
        %v1165 = vand.u32 %v1164, 3
        %vm1166 = vcmp.lt.s32.totalorder %v1165, 2
        %vm1167 = vcmp.eq.s32.totalorder %v1165, 0
        %v1168 = vxor.u32 %v1162, 2147483648
        %v1169 = vsel %vm1167, %v1161, %v1168
        %vm1170 = vcmp.eq.s32.totalorder %v1165, 2
        %v1171 = vxor.u32 %v1161, 2147483648
        %v1172 = vsel %vm1170, %v1171, %v1162
        %v1173 = vsel %vm1166, %v1169, %v1172
        %v1174 = vsel %vm1163, nan, %v1173
        %1175 = vset.pattern.permute.xlu0 1
        %1176 = vperm.xlu0 %1175, %v164
        %v1177 = vpop.permute.xlu0 %1176
        %v1179 = vmul.f32 %v1177, %v342
        %v1180 = vmul.f32 %v1177, %v446
        %v1181 = vmul.f32 %v1177, %v550
        %v1182 = vmul.f32 %v1177, %v654
        %v1183 = vmul.f32 %v1177, %v758
        %v1184 = vmul.f32 %v1177, %v862
        %v1185 = vmul.f32 %v1177, %v966
        %v1186 = vmul.f32 %v1177, %v1070
        %v1187 = vmul.f32 %v1177, %v1174
        %1188 = vst [vmem:[%s159] sm:$0x1f] %v1179
        %1189 = vst [vmem:[%s159 + $0x8] sm:$0x1f] %v1180
        %1190 = vst [vmem:[%s159 + $0x10] sm:$0x1f] %v1181
        %1191 = vst [vmem:[%s159 + $0x18] sm:$0x1f] %v1182
        %1192 = vst [vmem:[%s159 + $0x20] sm:$0x1f] %v1183
        %1193 = vst [vmem:[%s159 + $0x28] sm:$0x1f] %v1184
        %1194 = vst [vmem:[%s159 + $0x30] sm:$0x1f] %v1185
        %1195 = vst [vmem:[%s159 + $0x38] sm:$0x1f] %v1186
        %1196 = vst [vmem:[%s159 + $0x40] sm:$0x1f] %v1187
        %s1197 = sand.u32 %s74, 1
        %s1198 = scalar_lea.sflag [#allocation4], %s1197
        %s1199 = sand.u32 %s74, 1
        %s1200 = smul.addr %s1199, 72
        %s1201 = scalar_lea.vmem [#allocation5], %s1200
        // Predicated region
        $region33: #{tpu_custom_call.1} parent=27 // pred_check
          %p1202 = pneg %p84
        $region34: #{tpu_custom_call.1} parent=27 // pred_check_branch
          %1204 = sbr.rel (%p1202) target = $region36
        $region35: #{tpu_custom_call.1} parent=27 // pred_region
          %s1205 = smul.u32 9, %s19
          %s1207 = ssub.s32 1152, 1152
          %1208 = vsyncadd %s1198, %s1207
          %s1209 = smul.addr %s1205, 128
          %s1210 = scalar_lea.hbm %s2, %s1209
          %s1212 = sshll.u32 %s1201, 4
          %s1213 = int_to_ptr.vmem [resolvable:$true] %s1212
          %1215 = dma.vmem_to_hbm [thread:$0]  %s1213, 1152, %s1210, %s1198
        $region36: #{tpu_custom_call.1} parent=27 // pred_fallthru
          _
      $region28: #{tpu_custom_call.1} parent=5 // pred_fallthru
        _
      %p1216 = scmp.le.s32.totalorder 2, %s14
      // Predicated region
      $region37: #{tpu_custom_call.1} parent=5 // pred_check
        %p1217 = pneg %p1216
      $region38: #{tpu_custom_call.1} parent=5 // pred_check_branch
        %1219 = sbr.rel (%p1217) target = $region40
      $region39: #{tpu_custom_call.1} parent=5 // pred_region
        %s1220 = ssub.s32 %s14, 2
        // Predicated region
        $region41: #{tpu_custom_call.1} parent=39 // pred_check
          %p1221 = pneg %p90
        $region42: #{tpu_custom_call.1} parent=39 // pred_check_branch
          %1223 = sbr.rel (%p1221) target = $region44
        $region43: #{tpu_custom_call.1} parent=39 // pred_region
          %s1224 = sand.u32 %s75, 1
          %s1225 = scalar_lea.sflag [#allocation4], %s1224
          %s1226 = sand.u32 %s75, 1
          %s1227 = smul.addr %s1226, 72
          %s1228 = scalar_lea.vmem [#allocation5], %s1227
          %1229 = dma.done %s1225, 1152
        $region44: #{tpu_custom_call.1} parent=39 // pred_fallthru
          _
      $region40: #{tpu_custom_call.1} parent=5 // pred_fallthru
        _
    $region6: #{tpu_custom_call.1} parent=1 // loop_footer
      %s18 = sadd.s32 1, %s14
    $region7: #{tpu_custom_call.1} parent=1 // loop_footer_branch
      %13 = sbr.rel target = $region3
    $region8: #{tpu_custom_call.1} parent=1 // loop_exit
      _
    %1230 = vsyncpa [#allocation3], 1
    %s1231 = scalar_lea.sflag [#allocation3], 1
    %1232 = vsyncpa %s1231, 1
    %1233 = vsyncpa [#allocation4], 1
    %s1234 = scalar_lea.sflag [#allocation4], 1
    %1235 = vsyncpa %s1234, 1

</llo_original>
